<compile_context>
chip_gen: v7x
topology: tpu7x:2x2x1
jax: 0.10.0
libtpu: 0.0.40
codegen_flags: <defaults>
</compile_context>

<pallas_src>
import jax
import jax.numpy as jnp
from jax.experimental import pallas as pl
from jax.experimental.pallas import tpu as pltpu


def _latent_query_dma_kernel(q_hbm, o_hbm, sem):
    # q_hbm: (L, D) ref left in HBM (memory_space=pl.ANY).
    # o_hbm: (1, L, D) output ref in HBM.
    # Single HBM->HBM DMA into the (squeezed) leading-unit-dim slice.
    cp = pltpu.make_async_copy(q_hbm, o_hbm.at[0], sem)
    cp.start()
    cp.wait()


def latent_query_forward(query: jax.Array, *, use_pallas: bool = True) -> jax.Array:
    """Pallas equivalent of LatentQuery.forward: returns query[None, ...].

    query: (num_latents, num_latent_dim)
    returns: (1, num_latents, num_latent_dim), same dtype.
    """
    L, D = query.shape

    if not use_pallas:
        # Preferred in real models: free reshape, fuses into the consumer.
        return query[None, ...]

    bytes_accessed = 2 * L * D * query.dtype.itemsize
    return pl.pallas_call(
        _latent_query_dma_kernel,
        out_shape=jax.ShapeDtypeStruct((1, L, D), query.dtype),
        in_specs=[pl.BlockSpec(memory_space=pl.ANY)],
        out_specs=pl.BlockSpec(memory_space=pl.ANY),
        scratch_shapes=[pltpu.SemaphoreType.DMA(())],
        cost_estimate=pl.CostEstimate(
            flops=0, transcendentals=0, bytes_accessed=bytes_accessed
        ),
    )(query)


def init_latent_query_params(key, num_latents, num_latent_dim, init_scale=0.02,
                             dtype=jnp.float32):
    """Deterministic N(0, init_scale) init, mirroring _init_parameters."""
    return init_scale * jax.random.normal(key, (num_latents, num_latent_dim), dtype=dtype)


if __name__ == "__main__":
    key = jax.random.PRNGKey(0)
    num_latents = 8
    num_latent_dim = 32

    query = init_latent_query_params(key, num_latents, num_latent_dim)

    # Forward pass (the x argument of the PyTorch module is unused).
    out = latent_query_forward(query)          # Pallas single-DMA path
    out = jax.block_until_ready(out)

    # Also exercise the zero-cost fast path for parity.
    out_fast = jax.block_until_ready(latent_query_forward(query, use_pallas=False))

    # Correctness check against the trivial reference: query[None, ...]
    ref = query[None, ...]
    assert out.shape == (1, num_latents, num_latent_dim), out.shape
    assert out.dtype == query.dtype
    assert jnp.array_equal(out, ref), "Pallas output mismatch"
    assert jnp.array_equal(out_fast, ref), "Fast-path output mismatch"

    print("KERNEL_OK")
</pallas_src>

<mosaic_0001>
module attributes {stable_mosaic.version = 11 : i64} {
  func.func @_latent_query_dma_kernel(%arg0: memref<8x32xf32, #tpu.memory_space<any>>, %arg1: memref<1x8x32xf32, #tpu.memory_space<any>>, %arg2: memref<!tpu.dma_semaphore, #tpu.memory_space<semaphore_mem>>) attributes {dimension_semantics = [], scalar_prefetch = 0 : i64, scratch_operands = 1 : i64, tpu.core_type = #tpu.core_type<tc>} {
    %c0_i32 = arith.constant 0 : i32
    %c0_i32_0 = arith.constant 0 : i32
    %c0_i32_1 = arith.constant 0 : i32
    %0 = tpu.memref_slice %arg1[%c0_i32, %c0_i32_0, %c0_i32_1] : memref<1x8x32xf32, #tpu.memory_space<any>> -> memref<1x8x32xf32, #tpu.memory_space<any>>
    %1 = tpu.memref_squeeze %0 : memref<1x8x32xf32, #tpu.memory_space<any>> -> memref<8x32xf32, #tpu.memory_space<any>>
    tpu.enqueue_dma source(%arg0 : memref<8x32xf32, #tpu.memory_space<any>>) target(%1 : memref<8x32xf32, #tpu.memory_space<any>>) target_semaphore(%arg2 : memref<!tpu.dma_semaphore, #tpu.memory_space<semaphore_mem>>)
    %c0_i32_2 = arith.constant 0 : i32
    %c0_i32_3 = arith.constant 0 : i32
    %c0_i32_4 = arith.constant 0 : i32
    %2 = tpu.memref_slice %arg1[%c0_i32_2, %c0_i32_3, %c0_i32_4] : memref<1x8x32xf32, #tpu.memory_space<any>> -> memref<1x8x32xf32, #tpu.memory_space<any>>
    %3 = tpu.memref_squeeze %2 : memref<1x8x32xf32, #tpu.memory_space<any>> -> memref<8x32xf32, #tpu.memory_space<any>>
    tpu.wait_dma2 semaphore(%arg2 : memref<!tpu.dma_semaphore, #tpu.memory_space<semaphore_mem>>) src(%arg0 : memref<8x32xf32, #tpu.memory_space<any>>) dst(%3 : memref<8x32xf32, #tpu.memory_space<any>>)
    return
  }
}

</mosaic_0001>

<llo_original>
// kernel: tpu_custom_call.1
$region0: #{tpu_custom_call.1}
  #allocation0 [shape = 'u32[]', space=smem, size = 0x4, offset = 0x4, fixed_abs, tag = 'smem constant byte address 0x4 - core index']
  #allocation1 [shape = 'u32[144,128]{1,0:T(1,128)}', space=vmem, size = 0x12000, scoped, tag = 'internal scratch']
  #allocation2 [shape = 's32[1]{0}', space=sflag, size = 0x4, scoped, tag = 'scratch operand']
  #allocation3 [shape = 's32[]', space=sflag, size = 0x4, offset = 0, fixed_abs, tag = 'sflag constant byte address 0x0 - dummy sync flag']
  #allocation4 [shape = 'u32[0]{0}', space=smem, size = 0, offset = 0, fixed_abs, tag = 'smem constant byte address 0x0 - null']
  %s0 = inlined_call_operand.hbm [shape: f32[8,32], index: 0, kind: input, shape index: {}]
  %s1 = inlined_call_operand.hbm [shape: f32[1,8,32], index: 1, kind: output, shape index: {}]
  %s2 = sld [smem:[#allocation0]]
  $region2: #{tpu_custom_call.1} parent=0
    _
  %s4 = ssub.s32 1, %s2
  %s5 = scalar_select 0, %s4, %s2
  %s7 = sshll.u32 1, 14
  %s8 = sxor.u32 4294967295, %s7
  %s11 = sshll.u32 3, 24
  %s12 = sxor.u32 4294967295, %s11
  %s13 = sand.u32 0, %s12
  %s15 = sor.u32 %s13, 0
  %18 = dma.general %s0, 128, %s1, [#allocation2], [#allocation3], [#allocation4], %s15, 0
  %s19 = smul.u32 8, 1
  %s20 = sshll.u32 %s19, 4
  %21 = dma.done [#allocation2], %s20
  %22 = vsyncmov [#allocation2]
  %s23 = vpop.sfrf %22
  %p24 = scmp.eq.s32.totalorder %s23, 0
  %p25 = pneg %p24
  %27 = shalt.err (%p25)

</llo_original>
